<compile_context>
chip_gen: v7x
topology: tpu7x:2x2x1
jax: 0.10.0
libtpu: 0.0.40
codegen_flags: <defaults>
</compile_context>

<pallas_src>
import math
import functools

import jax
import jax.numpy as jnp
from jax import lax
from jax.experimental import pallas as pl
from jax.experimental.pallas import tpu as pltpu


def _round_up(x, m):
    return ((x + m - 1) // m) * m


def _fused_gconv_kernel(x_ref, w_ref, b_ref, o_ref, acc_ref, *, k_rem):
    # x_ref:   (TM, TK)   tile of flattened activations [B*T, N*C_in]
    # w_ref:   (TK, TN)   tile of the fused weight      [N*C_in, N*C_out (padded)]
    # b_ref:   (1,  TN)   fused bias tile (f32)
    # o_ref:   (TM, TN)   output tile
    # acc_ref: (TM, TN)   f32 accumulator scratch
    k = pl.program_id(2)
    nk = pl.num_programs(2)

    x = x_ref[...]
    if k_rem:
        # X is not padded along K, so the last K block is ragged: zero the stale
        # tail columns so they cannot contaminate the reduction (W is zero-padded
        # along K, but stale VMEM could hold NaN/Inf).
        col = lax.broadcasted_iota(jnp.int32, x.shape, 1)
        limit = jnp.where(k == nk - 1, k_rem, x.shape[1])
        x = jnp.where(col < limit, x, jnp.zeros_like(x))

    @pl.when(k == 0)
    def _():
        # Initialize the accumulator with the broadcast bias (saves the zero-fill
        # and the separate epilogue add).
        acc_ref[...] = jnp.broadcast_to(b_ref[...], acc_ref.shape)

    acc_ref[...] += jnp.dot(x, w_ref[...], preferred_element_type=jnp.float32)

    @pl.when(k == nk - 1)
    def _():
        o_ref[...] = jnp.maximum(acc_ref[...], 0.0).astype(o_ref.dtype)


def spatio_conv_nhwc(x_btnc, lk, theta, b, conv1x1_w=None, conv1x1_b=None,
                     *, tm=512, tn=1024, tk=512, compute_dtype=jnp.bfloat16):
    """Channels-last core: x_btnc [B, T, N, C_in] -> [B, T, N, C_out]."""
    B, T, N, C_in = x_btnc.shape
    C_out, Ks = theta.shape[1], theta.shape[2]

    # ---- fuse Lk x theta, the Align residual and the bias into (W, bias) ----
    w4 = jnp.einsum('knm,iok->mino', lk.astype(jnp.float32),
                    theta.astype(jnp.float32))              # [N, C_in, N, C_out]
    if C_in > C_out:                                         # Align: 1x1 conv
        e = conv1x1_w.reshape(C_out, C_in).astype(jnp.float32).T   # [C_in, C_out]
        bias_extra = conv1x1_b.reshape(C_out).astype(jnp.float32)
    elif C_in < C_out:                                       # Align: zero-pad channels
        e = jnp.eye(C_in, C_out, dtype=jnp.float32)
        bias_extra = jnp.zeros((C_out,), jnp.float32)
    else:                                                    # Align: identity (kt=1 pool)
        e = jnp.eye(C_in, dtype=jnp.float32)
        bias_extra = jnp.zeros((C_out,), jnp.float32)
    w4 = w4 + jnp.eye(N, dtype=jnp.float32)[:, None, :, None] * e[None, :, None, :]

    K = N * C_in
    NO = N * C_out
    BT = B * T

    # ---- tile sizes: (8,128)-legal, lane-dense output, VMEM-size independent of N ----
    tm_eff = min(tm, _round_up(BT, 8))
    tk_eff = K if K <= tk else tk
    no_pad = _round_up(NO, 128)
    tn_eff = min(tn, no_pad)
    no_pad = _round_up(no_pad, tn_eff)
    k_pad = _round_up(K, tk_eff)
    k_rem = K % tk_eff

    grid = (pl.cdiv(BT, tm_eff), no_pad // tn_eff, k_pad // tk_eff)

    # Fused weight: zero-pad K rows (protects the ragged reduction) and NO columns
    # (lane-dense stores), then cast to the MXU compute dtype.  W is rebuilt on host;
    # padding/cast are cheap relative to the X stream.
    w_flat = w4.reshape(K, NO)
    w_flat = jnp.pad(w_flat, ((0, k_pad - K), (0, no_pad - NO)))
    w_flat = w_flat.astype(compute_dtype)

    b_vec = b.reshape(C_out).astype(jnp.float32) + bias_extra
    bias_flat = jnp.broadcast_to(b_vec, (N, C_out)).reshape(1, NO)
    bias_flat = jnp.pad(bias_flat, ((0, 0), (0, no_pad - NO)))

    # Activations: no M/K padding -> no extra HBM copy of X.
    x_flat = x_btnc.reshape(BT, K).astype(compute_dtype)

    # Per-generation VMEM budget (v5e/v6e: 128 MiB physical, v7x: 64 MiB).
    try:
        vmem_cap = pltpu.get_tpu_info().vmem_capacity_bytes
    except Exception:  # pragma: no cover - conservative fallback
        vmem_cap = 64 * 1024 * 1024
    vmem_limit = min(int(vmem_cap * 3 // 4), 100 * 1024 * 1024)

    out = pl.pallas_call(
        functools.partial(_fused_gconv_kernel, k_rem=k_rem),
        out_shape=jax.ShapeDtypeStruct((BT, no_pad), x_btnc.dtype),
        grid_spec=pltpu.PrefetchScalarGridSpec(
            num_scalar_prefetch=0,
            grid=grid,
            in_specs=[
                pl.BlockSpec((tm_eff, tk_eff), lambda m, n, k: (m, k)),  # activations
                pl.BlockSpec((tk_eff, tn_eff), lambda m, n, k: (k, n)),  # fused weight
                pl.BlockSpec((1, tn_eff), lambda m, n, k: (0, n)),       # fused bias
            ],
            out_specs=pl.BlockSpec((tm_eff, tn_eff), lambda m, n, k: (m, n)),
            scratch_shapes=[pltpu.VMEM((tm_eff, tn_eff), jnp.float32)],
        ),
        compiler_params=pltpu.CompilerParams(
            dimension_semantics=("parallel", "parallel", "arbitrary"),
            vmem_limit_bytes=vmem_limit),
    )(x_flat, w_flat, bias_flat)

    return out[:, :NO].reshape(B, T, N, C_out)


def spatio_conv_layer(x_nchw, lk, theta, b, conv1x1_w=None, conv1x1_b=None,
                      *, tm=512, tn=1024, tk=512, compute_dtype=jnp.bfloat16):
    """PyTorch-layout wrapper: x [B, C_in, T, N] -> [B, C_out, T, N].

    NOTE: in a full STGCN stack keep activations channels-last and call
    spatio_conv_nhwc directly — these two transposes are full HBM passes and
    exist only for parity with the NCHW spec at the model boundary.
    """
    x = jnp.transpose(x_nchw, (0, 2, 3, 1))                  # [B, T, N, C_in]
    out = spatio_conv_nhwc(x, lk, theta, b, conv1x1_w, conv1x1_b,
                           tm=tm, tn=tn, tk=tk, compute_dtype=compute_dtype)
    return jnp.transpose(out, (0, 3, 1, 2))                  # [B, C_out, T, N]


# ------------------------- pure-JAX reference & self-test -------------------------

def _ref_forward(x, lk, theta, b, conv1x1_w=None, conv1x1_b=None):
    C_in = x.shape[1]
    C_out = theta.shape[1]
    x_c = jnp.einsum('knm,bitm->bitkn', lk, x)
    x_gc = jnp.einsum('iok,bitkn->botn', theta, x_c) + b
    if C_in > C_out:
        x_in = (jnp.einsum('oi,bitn->botn', conv1x1_w.reshape(C_out, C_in), x)
                + conv1x1_b.reshape(1, C_out, 1, 1))
    elif C_in < C_out:
        x_in = jnp.pad(x, ((0, 0), (0, C_out - C_in), (0, 0), (0, 0)))
    else:
        x_in = x
    return jnp.maximum(x_gc + x_in, 0.0)


if __name__ == "__main__":
    key = jax.random.PRNGKey(0)

    def make_params(k, n, ks, c_in, c_out):
        k2, k3, k4, k5, k6 = jax.random.split(k, 5)
        lk = jax.random.normal(k2, (ks, n, n), jnp.float32) / n
        # reset_parameters(): kaiming_uniform_(a=sqrt(5)) -> bound = 1/sqrt(fan_in)
        bound = 1.0 / math.sqrt(c_out * ks)
        theta = jax.random.uniform(k3, (c_in, c_out, ks), jnp.float32, -bound, bound)
        b = jax.random.uniform(k4, (1, c_out, 1, 1), jnp.float32, -bound, bound)
        conv_w = jax.random.normal(k5, (c_out, c_in), jnp.float32) / math.sqrt(c_in)
        conv_b = jax.random.normal(k6, (c_out,), jnp.float32) * 0.1
        return lk, theta, b, conv_w, conv_b

    # (B, T, N, Ks, C_in, C_out): all three Align branches at small shapes, plus one
    # case large enough to exercise multi-tile M/NO/K grids and the ragged-K mask.
    cases = [
        (2, 8, 16, 3, 4, 4),      # identity align
        (2, 8, 16, 3, 4, 8),      # zero-pad align
        (2, 8, 16, 3, 8, 4),      # 1x1-conv align
        (4, 32, 48, 3, 24, 40),   # multi-tile grid, ragged K tail, padded NO
    ]
    for idx, (B, T, N, Ks, c_in, c_out) in enumerate(cases):
        kx, kp = jax.random.split(jax.random.fold_in(key, idx))
        x = jax.random.normal(kx, (B, c_in, T, N), jnp.float32)
        lk, theta, b, conv_w, conv_b = make_params(kp, N, Ks, c_in, c_out)
        extra = (conv_w, conv_b) if c_in > c_out else (None, None)

        ref = _ref_forward(x, lk, theta, b, *extra)

        # Exact-semantics check: f32 compute path, tight tolerance.
        out_f32 = jax.block_until_ready(
            spatio_conv_layer(x, lk, theta, b, *extra, compute_dtype=jnp.float32))
        assert out_f32.shape == (B, c_out, T, N), out_f32.shape
        err_f32 = float(jnp.max(jnp.abs(out_f32 - ref)))
        assert jnp.allclose(out_f32, ref, atol=5e-4, rtol=5e-4), (idx, err_f32)

        # Default fast path: bf16 MXU inputs, f32 accumulation (looser tolerance).
        out_bf = jax.block_until_ready(spatio_conv_layer(x, lk, theta, b, *extra))
        assert out_bf.shape == (B, c_out, T, N), out_bf.shape
        scale = float(jnp.max(jnp.abs(ref))) + 1e-6
        rel = float(jnp.max(jnp.abs(out_bf - ref))) / scale
        assert rel < 3e-2, (idx, rel)

    print("KERNEL_OK")
</pallas_src>

<mosaic_0001>
module attributes {stable_mosaic.version = 11 : i64} {
  func.func @_fused_gconv_kernel(%arg0: i32, %arg1: i32, %arg2: i32, %arg3: memref<16x64xf32, #tpu.memory_space<vmem>>, %arg4: memref<64x128xf32, #tpu.memory_space<vmem>>, %arg5: memref<1x128xf32, #tpu.memory_space<vmem>>, %arg6: memref<16x128xf32, #tpu.memory_space<vmem>>, %arg7: memref<16x128xf32, #tpu.memory_space<vmem>>) attributes {dimension_semantics = [#tpu.dimension_semantics<parallel>, #tpu.dimension_semantics<parallel>, #tpu.dimension_semantics<arbitrary>], iteration_bounds = array<i64: 1, 1, 1>, scalar_prefetch = 0 : i64, scratch_operands = 1 : i64, tpu.core_type = #tpu.core_type<tc>, window_params = [{transform_indices = @transform_0, window_bounds = array<i64: 16, 64>}, {transform_indices = @transform_1, window_bounds = array<i64: 64, 128>}, {transform_indices = @transform_2, window_bounds = array<i64: 1, 128>}, {transform_indices = @transform_3, window_bounds = array<i64: 16, 128>}]} {
    %c0 = arith.constant 0 : index
    %c0_0 = arith.constant 0 : index
    %0 = vector.load %arg3[%c0, %c0_0] : memref<16x64xf32, #tpu.memory_space<vmem>>, vector<16x64xf32>
    %c0_i32 = arith.constant 0 : i32
    %1 = arith.cmpi eq, %arg2, %c0_i32 : i32
    %2 = arith.extui %1 : i1 to i32
    %c0_i32_1 = arith.constant 0 : i32
    %3 = arith.cmpi ne, %2, %c0_i32_1 : i32
    scf.if %3 {
      %c0_10 = arith.constant 0 : index
      %c0_11 = arith.constant 0 : index
      %12 = vector.load %arg5[%c0_10, %c0_11] : memref<1x128xf32, #tpu.memory_space<vmem>>, vector<1x128xf32>
      %13 = vector.shape_cast %12 : vector<1x128xf32> to vector<1x128xf32>
      %14 = vector.broadcast %13 : vector<1x128xf32> to vector<16x128xf32>
      %c0_12 = arith.constant 0 : index
      %c0_13 = arith.constant 0 : index
      %15 = vector.load %arg7[%c0_12, %c0_13] : memref<16x128xf32, #tpu.memory_space<vmem>>, vector<16x128xf32>
      tpu.vector_store %arg7[%c0_12, %c0_13], %14 {strides = array<i32>} : memref<16x128xf32, #tpu.memory_space<vmem>>, vector<16x128xf32>,
    } else {
    }
    %c0_2 = arith.constant 0 : index
    %c0_3 = arith.constant 0 : index
    %4 = vector.load %arg7[%c0_2, %c0_3] : memref<16x128xf32, #tpu.memory_space<vmem>>, vector<16x128xf32>
    %c0_4 = arith.constant 0 : index
    %c0_5 = arith.constant 0 : index
    %5 = vector.load %arg4[%c0_4, %c0_5] : memref<64x128xf32, #tpu.memory_space<vmem>>, vector<64x128xf32>
    %cst = arith.constant dense<0.000000e+00> : vector<16x128xf32>
    %6 = tpu.matmul %0, %5, %cst {dimension_numbers = #tpu.dot_dimension_numbers<[1], [0], [0], [1], [0, 0, 1, 1], [], []>} : vector<16x64xf32>, vector<64x128xf32>, vector<16x128xf32> -> vector<16x128xf32>
    %7 = arith.addf %4, %6 : vector<16x128xf32>
    %c0_6 = arith.constant 0 : index
    %c0_7 = arith.constant 0 : index
    %8 = vector.load %arg7[%c0_6, %c0_7] : memref<16x128xf32, #tpu.memory_space<vmem>>, vector<16x128xf32>
    tpu.vector_store %arg7[%c0_6, %c0_7], %7 {strides = array<i32>} : memref<16x128xf32, #tpu.memory_space<vmem>>, vector<16x128xf32>,
    %c0_i32_8 = arith.constant 0 : i32
    %9 = arith.cmpi eq, %arg2, %c0_i32_8 : i32
    %10 = arith.extui %9 : i1 to i32
    %c0_i32_9 = arith.constant 0 : i32
    %11 = arith.cmpi ne, %10, %c0_i32_9 : i32
    scf.if %11 {
      %c0_10 = arith.constant 0 : index
      %c0_11 = arith.constant 0 : index
      %12 = vector.load %arg7[%c0_10, %c0_11] : memref<16x128xf32, #tpu.memory_space<vmem>>, vector<16x128xf32>
      %cst_12 = arith.constant 0.000000e+00 : f32
      %13 = vector.broadcast %cst_12 : f32 to vector<16x128xf32>
      %14 = arith.maximumf %12, %13 : vector<16x128xf32>
      %c0_13 = arith.constant 0 : index
      %c0_14 = arith.constant 0 : index
      %15 = vector.load %arg6[%c0_13, %c0_14] : memref<16x128xf32, #tpu.memory_space<vmem>>, vector<16x128xf32>
      tpu.vector_store %arg6[%c0_13, %c0_14], %14 {strides = array<i32>} : memref<16x128xf32, #tpu.memory_space<vmem>>, vector<16x128xf32>,
    } else {
    }
    return
  }
  func.func @transform_0(%arg0: i32, %arg1: i32, %arg2: i32) -> (i32, i32) {
    %c0_i32 = arith.constant 0 : i32
    return %arg0, %arg2 : i32, i32
  }
  func.func @transform_1(%arg0: i32, %arg1: i32, %arg2: i32) -> (i32, i32) {
    %c0_i32 = arith.constant 0 : i32
    return %arg2, %arg1 : i32, i32
  }
  func.func @transform_2(%arg0: i32, %arg1: i32, %arg2: i32) -> (i32, i32) {
    %c0_i32 = arith.constant 0 : i32
    %c0_i32_0 = arith.constant 0 : i32
    return %c0_i32, %arg1 : i32, i32
  }
  func.func @transform_3(%arg0: i32, %arg1: i32, %arg2: i32) -> (i32, i32) {
    %c0_i32 = arith.constant 0 : i32
    return %arg0, %arg1 : i32, i32
  }
}

</mosaic_0001>

<llo_original>
// kernel: tpu_custom_call.1
$region0: #{tpu_custom_call.1}
  #allocation0 [shape = 'u32[]', space=smem, size = 0x4, offset = 0x4, fixed_abs, tag = 'smem constant byte address 0x4 - core index']
  #allocation1 [shape = 'u32[144,128]{1,0:T(1,128)}', space=vmem, size = 0x12000, scoped, tag = 'internal scratch']
  #allocation2 [shape = 'f32[16,128]{1,0:T(8,128)}', space=vmem, size = 0x2000, scoped, tag = 'scratch operand']
  %s0 = inlined_call_operand.hbm [shape: f32[16,64], index: 0, kind: input, shape index: {}]
  %s1 = inlined_call_operand.hbm [shape: f32[64,128], index: 1, kind: input, shape index: {}]
  %s2 = inlined_call_operand.vmem [shape: f32[1,128], index: 2, kind: input, shape index: {}]
  %s3 = inlined_call_operand.hbm [shape: f32[16,128], index: 3, kind: output, shape index: {}]
  %s4 = sld [smem:[#allocation0]]
  $region38: #{tpu_custom_call.1} parent=0
    _
  %s6 = ssub.s32 1, %s4
  %s7 = scalar_select 0, %s6, %s4
  $region1: #{tpu_custom_call.1} parent=0
    #allocation3 [shape = 'u8[8192]{0}', space=vmem, size = 0x2000, scoped, tag = 'input window, operand 0, single buffered']
    #allocation4 [shape = 's32[1]{0}', space=sflag, size = 0x4, scoped, tag = 'scoped memory for tpu_custom_call.1']
    #allocation5 [shape = 's32[1]{0}', space=sflag, size = 0x4, scoped, tag = 'scoped memory for tpu_custom_call.1']
    #allocation6 [shape = 'u8[32768]{0}', space=vmem, size = 0x8000, scoped, tag = 'input window, operand 1, single buffered']
    #allocation7 [shape = 's32[1]{0}', space=sflag, size = 0x4, scoped, tag = 'scoped memory for tpu_custom_call.1']
    #allocation8 [shape = 'u8[8192]{0}', space=vmem, size = 0x2000, scoped, tag = 'output window, operand 0, single buffered']
    %8 = vsyncpa [#allocation4], 0
    %9 = vsyncpa [#allocation7], 0
    %10 = vsyncpa [#allocation5], 0
    // Predicated region
    $region2: #{tpu_custom_call.1} parent=1 // pred_check
      _
    $region3: #{tpu_custom_call.1} parent=1 // pred_check_branch
      %12 = sbr.rel (0) target = $region5
    $region4: #{tpu_custom_call.1} parent=1 // pred_region
      %s14 = ssub.s32 256, 256
      %15 = vsyncadd [#allocation4], %s14
      %s16 = sshll.u32 [#allocation3], 4
      %s17 = int_to_ptr.vmem [resolvable:$true] %s16
      %22 = dma.hbm_to_vmem [thread:$0]  %s0, 256, %s17, [#allocation4], 128, 128, 8
    $region5: #{tpu_custom_call.1} parent=1 // pred_fallthru
      _
    // Predicated region
    $region6: #{tpu_custom_call.1} parent=1 // pred_check
      _
    $region7: #{tpu_custom_call.1} parent=1 // pred_check_branch
      %24 = sbr.rel (0) target = $region9
    $region8: #{tpu_custom_call.1} parent=1 // pred_region
      %s26 = ssub.s32 1024, 1024
      %27 = vsyncadd [#allocation7], %s26
      %s28 = sshll.u32 [#allocation6], 4
      %s29 = int_to_ptr.vmem [resolvable:$true] %s28
      %34 = dma.hbm_to_vmem [thread:$0]  %s1, 1024, %s29, [#allocation7], 128, 128, 8
    $region9: #{tpu_custom_call.1} parent=1 // pred_fallthru
      _
    // Predicated region
    $region10: #{tpu_custom_call.1} parent=1 // pred_check
      _
    $region11: #{tpu_custom_call.1} parent=1 // pred_check_branch
      %36 = sbr.rel (0) target = $region13
    $region12: #{tpu_custom_call.1} parent=1 // pred_region
      _
    $region13: #{tpu_custom_call.1} parent=1 // pred_fallthru
      _
    // Predicated region
    $region14: #{tpu_custom_call.1} parent=1 // pred_check
      _
    $region15: #{tpu_custom_call.1} parent=1 // pred_check_branch
      %38 = sbr.rel (0) target = $region17
    $region16: #{tpu_custom_call.1} parent=1 // pred_region
      %39 = dma.done [#allocation4], 256
    $region17: #{tpu_custom_call.1} parent=1 // pred_fallthru
      _
    // Predicated region
    $region18: #{tpu_custom_call.1} parent=1 // pred_check
      _
    $region19: #{tpu_custom_call.1} parent=1 // pred_check_branch
      %41 = sbr.rel (0) target = $region21
    $region20: #{tpu_custom_call.1} parent=1 // pred_region
      %42 = dma.done [#allocation7], 1024
    $region21: #{tpu_custom_call.1} parent=1 // pred_fallthru
      _
    %v43 = vld [vmem:[#allocation3] sm:$0xff]
    %v44 = vld [vmem:[#allocation3 + $0x8] sm:$0xff]
    %p45 = scmp.eq.s32.totalorder 0, 0
    // Predicated region
    $region22: #{tpu_custom_call.1} parent=1 // pred_check
      %p46 = pneg %p45
    $region23: #{tpu_custom_call.1} parent=1 // pred_check_branch
      %48 = sbr.rel (%p46) target = $region25
    $region24: #{tpu_custom_call.1} parent=1 // pred_region
      %v49 = vld [vmem:[%s2] sm:$0x1]
      %v51 = vlaneseq
      %v52 = vshrl.u32 %v51, 7
      %v53 = vsub.s32 0, %v52
      %v54 = vrot.slane %v49, %v53
      %56 = vst [vmem:[#allocation2] sm:$0xff] %v54
      %57 = vst [vmem:[#allocation2 + $0x8] sm:$0xff] %v54
    $region25: #{tpu_custom_call.1} parent=1 // pred_fallthru
      _
    %v58 = vld [vmem:[#allocation2] sm:$0xff]
    %v59 = vld [vmem:[#allocation2 + $0x8] sm:$0xff]
    %v60 = vld [vmem:[#allocation6] sm:$0xff]
    %v61 = vld [vmem:[#allocation6 + $0x8] sm:$0xff]
    %v62 = vld [vmem:[#allocation6 + $0x10] sm:$0xff]
    %v63 = vld [vmem:[#allocation6 + $0x18] sm:$0xff]
    %v64 = vld [vmem:[#allocation6 + $0x20] sm:$0xff]
    %v65 = vld [vmem:[#allocation6 + $0x28] sm:$0xff]
    %v66 = vld [vmem:[#allocation6 + $0x30] sm:$0xff]
    %v67 = vld [vmem:[#allocation6 + $0x38] sm:$0xff]
    %vm68 = vcmask 523264
    %v70 = vsel %vm68, %v43, 0
    %v73 = vsel %vm68, %v44, 0
    %75 = vmatprep.subr.mxu0 0.0
    %76 = vmatpush1.msra.mxu0 %v60
    %77 = vmatprep.subr.mxu0 0.0
    %78 = vmatpush1.msra.mxu0 %v61
    %79 = vmatprep.subr.mxu0 0.0
    %80 = vmatpush1.msra.mxu0 %v62
    %81 = vmatprep.subr.mxu0 0.0
    %82 = vmatpush1.msra.mxu0 %v63
    %83 = vmatprep.subr.mxu0 0.0
    %84 = vmatpush1.msra.mxu0 %v64
    %85 = vmatprep.subr.mxu0 0.0
    %86 = vmatpush1.msra.mxu0 %v65
    %87 = vmatprep.subr.mxu0 0.0
    %88 = vmatpush1.msra.mxu0 %v66
    %89 = vmatprep.subr.mxu0 0.0
    %90 = vmatpush1.msra.mxu0 %v67
    %91 = vmatprep.subr.mxu0 0.0
    %92 = vmatpush1.msra.mxu0 0.0
    %93 = vmatprep.subr.mxu0 0.0
    %94 = vmatpush1.msra.mxu0 0.0
    %95 = vmatprep.subr.mxu0 0.0
    %96 = vmatpush1.msra.mxu0 0.0
    %97 = vmatprep.subr.mxu0 0.0
    %98 = vmatpush1.msra.mxu0 0.0
    %99 = vmatprep.subr.mxu0 0.0
    %100 = vmatpush1.msra.mxu0 0.0
    %101 = vmatprep.subr.mxu0 0.0
    %102 = vmatpush1.msra.mxu0 0.0
    %103 = vmatprep.subr.mxu0 0.0
    %104 = vmatpush1.msra.mxu0 0.0
    %105 = vmatprep.subr.mxu0 0.0
    %106 = vmatpush1.msra.mxu0 0.0
    %107 = vmatprep.subr.mxu0 0.0
    %108 = vmatpush1.msra.mxu0 0.0
    %109 = vmatprep.subr.mxu0 0.0
    %110 = vmatpush1.msra.mxu0 0.0
    %111 = vmatprep.subr.mxu0 0.0
    %112 = vmatpush1.msra.mxu0 0.0
    %113 = vmatprep.subr.mxu0 0.0
    %114 = vmatpush1.msra.mxu0 0.0
    %115 = vmatprep.subr.mxu0 0.0
    %116 = vmatpush1.msra.mxu0 0.0
    %117 = vmatprep.subr.mxu0 0.0
    %118 = vmatpush1.msra.mxu0 0.0
    %119 = vmatprep.subr.mxu0 0.0
    %120 = vmatpush1.msra.mxu0 0.0
    %121 = vmatprep.subr.mxu0 0.0
    %122 = vmatpush1.msra.mxu0 0.0
    %123 = vmatprep.subr.mxu0 0.0
    %124 = vmatpush1.msra.mxu0 0.0
    %125 = vmatprep.subr.mxu0 0.0
    %126 = vmatpush1.msra.mxu0 0.0
    %127 = vmatprep.subr.mxu0 0.0
    %128 = vmatpush1.msra.mxu0 0.0
    %129 = vmatprep.subr.mxu0 0.0
    %130 = vmatpush1.msra.mxu0 0.0
    %131 = vmatprep.subr.mxu0 0.0
    %132 = vmatpush1.msra.mxu0 0.0
    %133 = vmatprep.subr.mxu0 0.0
    %134 = vmatpush1.msra.mxu0 0.0
    %135 = vmatprep.subr.mxu0 0.0
    %136 = vmatpush1.msra.mxu0 0.0
    %137 = vmatprep.subr.mxu0 0.0
    %138 = vmatpush1.msra.mxu0 0.0
    %139 = vmatprep.mubr.f32.mxu0 0.0
    %140 = vmatmul.mubr.f32.gmra.mrb[0].mxu0 %v70
    %v141 = vpop.f32.mrb[0].mxu0
    %v142 = vadd.f32 0.0, %v141
    %v143 = vpop.f32.mrb[0].mxu0
    %144 = vmatprep.mubr.f32.mxu0 0.0
    %145 = vmatmul.mubr.f32.gmra.mrb[0].mxu0 %v73
    %v146 = vpop.f32.mrb[0].mxu0
    %v147 = vadd.f32 0.0, %v146
    %v148 = vpop.f32.mrb[0].mxu0
    %149 = vdwg.mxu0
    %v150 = vadd.f32 %v58, %v142
    %v151 = vadd.f32 %v59, %v147
    %152 = vst [vmem:[#allocation2] sm:$0xff] %v150
    %153 = vst [vmem:[#allocation2 + $0x8] sm:$0xff] %v151
    // Predicated region
    $region26: #{tpu_custom_call.1} parent=1 // pred_check
      %p154 = pneg %p45
    $region27: #{tpu_custom_call.1} parent=1 // pred_check_branch
      %156 = sbr.rel (%p154) target = $region29
    $region28: #{tpu_custom_call.1} parent=1 // pred_region
      %v157 = vld [vmem:[#allocation2] sm:$0xff]
      %v158 = vld [vmem:[#allocation2 + $0x8] sm:$0xff]
      %v159 = vmax.f32 %v157, 0.0
      %v160 = vmax.f32 %v158, 0.0
      %161 = vst [vmem:[#allocation8] sm:$0xff] %v159
      %162 = vst [vmem:[#allocation8 + $0x8] sm:$0xff] %v160
    $region29: #{tpu_custom_call.1} parent=1 // pred_fallthru
      _
    // Predicated region
    $region30: #{tpu_custom_call.1} parent=1 // pred_check
      _
    $region31: #{tpu_custom_call.1} parent=1 // pred_check_branch
      %164 = sbr.rel (0) target = $region33
    $region32: #{tpu_custom_call.1} parent=1 // pred_region
      %s166 = ssub.s32 256, 256
      %167 = vsyncadd [#allocation5], %s166
      %s168 = sshll.u32 [#allocation8], 4
      %s169 = int_to_ptr.vmem [resolvable:$true] %s168
      %174 = dma.vmem_to_hbm [thread:$0]  %s169, 256, %s3, [#allocation5], 128, 128, 8
    $region33: #{tpu_custom_call.1} parent=1 // pred_fallthru
      _
    // Predicated region
    $region34: #{tpu_custom_call.1} parent=1 // pred_check
      _
    $region35: #{tpu_custom_call.1} parent=1 // pred_check_branch
      %176 = sbr.rel (0) target = $region37
    $region36: #{tpu_custom_call.1} parent=1 // pred_region
      %177 = dma.done [#allocation5], 256
    $region37: #{tpu_custom_call.1} parent=1 // pred_fallthru
      _
    %178 = vsyncpa [#allocation4], 1
    %179 = vsyncpa [#allocation7], 1
    %180 = vsyncpa [#allocation5], 1

</llo_original>
